<compile_context>
chip_gen: v7x
topology: tpu7x:2x2x1
jax: 0.10.0
libtpu: 0.0.40
codegen_flags: <defaults>
</compile_context>

<pallas_src>
import math

import jax
import jax.numpy as jnp
from jax.experimental import pallas as pl
from jax.experimental.pallas import tpu as pltpu


# --------------------------------------------------------------------------- table

def make_pe_table(d_model: int, max_len: int = 5000, dtype=jnp.float32) -> jnp.ndarray:
    """Deterministic sinusoidal table, identical math to the PyTorch __init__.

    fp32 math for accuracy; cast to the compute dtype only at the end so callers
    can build the table once in bf16 and avoid a per-call convert pass.
    """
    if d_model % 2 != 0:
        # The PyTorch module also fails for odd d_model (pe[:, 1::2] shape mismatch).
        raise ValueError("PositionalEncoding requires an even d_model.")
    position = jnp.arange(0, max_len, dtype=jnp.float32)[:, None]             # (L, 1)
    div_term = jnp.exp(
        jnp.arange(0, d_model, 2, dtype=jnp.float32) * (-math.log(10000.0) / d_model)
    )                                                                          # (D/2,)
    angles = position * div_term                                               # (L, D/2)
    pe = jnp.zeros((max_len, d_model), dtype=jnp.float32)
    pe = pe.at[:, 0::2].set(jnp.sin(angles))
    pe = pe.at[:, 1::2].set(jnp.cos(angles))
    return pe.astype(dtype)                                                    # (L, D)


# --------------------------------------------------------------------------- kernel

def _pe_add_kernel(x_ref, pe_ref, o_ref):
    # x_ref/o_ref: (ts, tb, D); pe_ref: (ts, 1, D).
    # The size-1 batch axis broadcasts along sublanes and fuses into the add —
    # no tiled intermediate, no extra VMEM traffic.
    o_ref[...] = (x_ref[...] + pe_ref[...]).astype(o_ref.dtype)


# ----------------------------------------------------------------- hardware / tiles

_MIN_STEP_BYTES_MULTICORE = 8 * 1024 * 1024   # ~0.35 us of HBM time at 3.2 TB/s << 8 MiB


def _round_up(x: int, m: int) -> int:
    return ((x + m - 1) // m) * m


def _sublane_multiple(dtype) -> int:
    # 8 for f32, 16 for bf16, 32 for int8/fp8 (packed sublanes).
    return max(8, 32 // jnp.dtype(dtype).itemsize)


def _block_vmem_bytes(ts: int, tb: int, d: int, dtype) -> int:
    """Padded VMEM footprint of one (ts, tb, d) block under native (sublane, lane) tiling."""
    itemsize = jnp.dtype(dtype).itemsize
    sm = _sublane_multiple(dtype)
    return ts * _round_up(max(tb, 1), sm) * _round_up(d, 128) * itemsize


def _hw_params():
    """(vmem_limit_bytes, tensorcores_per_chip) — generation-aware, with safe fallbacks."""
    try:
        kind = jax.devices()[0].device_kind.lower()
    except Exception:  # pragma: no cover
        kind = ""
    n_cores = 2 if any(t in kind for t in ("v7", "v4", "v5p")) else 1
    try:
        vmem_cap = int(pltpu.get_tpu_info().vmem_capacity_bytes)
    except Exception:  # pragma: no cover
        vmem_cap = 64 * 1024 * 1024  # conservative default (v7x per-TensorCore)
    limit = max(32 * 1024 * 1024, (vmem_cap * 3) // 4)
    if "v7" in kind:
        limit = min(limit, 48 * 1024 * 1024)    # 64 MiB physical per TC on v7x
    else:
        limit = min(limit, 100 * 1024 * 1024)   # 128 MiB physical on v5e/v6e
    return limit, n_cores


def _choose_tiles(S: int, B: int, D: int, dtype, vmem_budget_bytes: int, n_cores: int):
    """Pick (ts, tb) so the double-buffered working set fits the VMEM budget."""

    def working_set(ts, tb):
        # double-buffered x + out + pe blocks
        return 2 * (2 * _block_vmem_bytes(ts, tb, D, dtype)
                    + _block_vmem_bytes(ts, 1, D, dtype))

    # Batch tile: full B unless even an 8-row block overflows; then shrink in
    # multiples of 8 (keeps the (8,128) rule satisfied when tb != B).
    tb = B
    ts_probe = min(8, S)
    if B > 8:
        while tb > 8 and working_set(ts_probe, tb) > vmem_budget_bytes:
            tb = max(8, (tb // 2 // 8) * 8)
    # TODO(synk): if B <= 8 and D is so large that even (8, B, D) overflows, add a
    # third grid axis over D; not needed for realistic transformer shapes.

    # Seq tile: as large as fits.  Single-TC chips (v5e/v6e): no artificial split.
    # 2-TC chips (v7x): split into 2 steps only when each step moves enough bytes.
    per_row_vmem = working_set(1, tb)
    ts = max(1, vmem_budget_bytes // max(per_row_vmem, 1))
    ts = min(ts, S)
    if n_cores >= 2 and ts >= S and S > 1:
        half = pl.cdiv(S, 2)
        itemsize = jnp.dtype(dtype).itemsize
        hbm_per_row = 2 * tb * D * itemsize + D * itemsize   # x read + out write + pe read
        if half * hbm_per_row >= _MIN_STEP_BYTES_MULTICORE:
            ts = half
    if 8 <= ts < S:
        ts = (ts // 8) * 8          # keep full tiles clean; ragged tail handled by masking
    ts = max(1, min(ts, S))
    return ts, tb


# --------------------------------------------------------------------------- wrapper

def positional_encoding_forward(x: jnp.ndarray, pe_table: jnp.ndarray,
                                *, donate_x: bool = False) -> jnp.ndarray:
    """x: (S, B, D); pe_table: (max_len, D) (ideally already in x.dtype).

    Returns x + pe[:S] broadcast over the batch axis (same as the PyTorch forward).
    """
    S, B, D = x.shape
    if pe_table.shape[0] < S:
        raise ValueError("sequence length exceeds max_len of the positional table")

    pe = pe_table[:S]
    if pe.dtype != x.dtype:
        # Intentional: pe is added in x's dtype (bandwidth); build the table in the
        # compute dtype up front to avoid this per-call convert.
        pe = pe.astype(x.dtype)
    pe3 = pe.reshape(S, 1, D)                      # explicit size-1 batch axis

    vmem_limit, n_cores = _hw_params()
    vmem_budget = int(vmem_limit * 0.85)           # headroom under the compiled limit
    ts, tb = _choose_tiles(S, B, D, x.dtype, vmem_budget, n_cores)

    grid = (pl.cdiv(S, ts), pl.cdiv(B, tb))        # batch innermost: pe block stays resident

    out = pl.pallas_call(
        _pe_add_kernel,
        out_shape=jax.ShapeDtypeStruct((S, B, D), x.dtype),
        grid_spec=pltpu.PrefetchScalarGridSpec(
            num_scalar_prefetch=0,
            grid=grid,
            in_specs=[
                pl.BlockSpec((ts, tb, D), lambda i, j: (i, j, 0)),   # x
                pl.BlockSpec((ts, 1, D), lambda i, j: (i, 0, 0)),    # pe (batch-invariant)
            ],
            out_specs=pl.BlockSpec((ts, tb, D), lambda i, j: (i, j, 0)),
        ),
        compiler_params=pltpu.CompilerParams(
            dimension_semantics=("parallel", "parallel"),
            vmem_limit_bytes=vmem_limit,
        ),
        input_output_aliases=({0: 0} if donate_x else {}),
    )(x, pe3)

    return out


# --------------------------------------------------------------------------- demo

if __name__ == "__main__":
    # Small shapes consistent with the module: seq=8, batch=2, d_model=32.
    S, B, D = 8, 2, 32
    max_len = 64

    key = jax.random.PRNGKey(0)
    x = jax.random.normal(key, (S, B, D), dtype=jnp.float32)

    # Table built once, already in the compute dtype (no per-call convert).
    pe_table = make_pe_table(D, max_len=max_len, dtype=x.dtype)

    out = positional_encoding_forward(x, pe_table)
    out = jax.block_until_ready(out)

    # Reference check in plain JAX (same math as the PyTorch forward).
    ref = x + pe_table[:S][:, None, :]
    assert out.shape == (S, B, D)
    assert jnp.allclose(out, ref, atol=1e-6, rtol=1e-6)

    print("KERNEL_OK")
</pallas_src>

<mosaic_0001>
module attributes {stable_mosaic.version = 11 : i64} {
  func.func @_pe_add_kernel(%arg0: i32, %arg1: i32, %arg2: memref<8x2x32xf32, #tpu.memory_space<vmem>>, %arg3: memref<8x1x32xf32, #tpu.memory_space<vmem>>, %arg4: memref<8x2x32xf32, #tpu.memory_space<vmem>>) attributes {dimension_semantics = [#tpu.dimension_semantics<parallel>, #tpu.dimension_semantics<parallel>], iteration_bounds = array<i64: 1, 1>, scalar_prefetch = 0 : i64, scratch_operands = 0 : i64, tpu.core_type = #tpu.core_type<tc>, window_params = [{transform_indices = @transform_0, window_bounds = array<i64: 8, 2, 32>}, {transform_indices = @transform_1, window_bounds = array<i64: 8, 1, 32>}, {transform_indices = @transform_2, window_bounds = array<i64: 8, 2, 32>}]} {
    %c0 = arith.constant 0 : index
    %c0_0 = arith.constant 0 : index
    %c0_1 = arith.constant 0 : index
    %0 = vector.load %arg2[%c0, %c0_0, %c0_1] : memref<8x2x32xf32, #tpu.memory_space<vmem>>, vector<8x2x32xf32>
    %c0_2 = arith.constant 0 : index
    %c0_3 = arith.constant 0 : index
    %c0_4 = arith.constant 0 : index
    %1 = vector.load %arg3[%c0_2, %c0_3, %c0_4] : memref<8x1x32xf32, #tpu.memory_space<vmem>>, vector<8x1x32xf32>
    %2 = vector.broadcast %1 : vector<8x1x32xf32> to vector<8x2x32xf32>
    %3 = arith.addf %0, %2 : vector<8x2x32xf32>
    %c0_5 = arith.constant 0 : index
    %c0_6 = arith.constant 0 : index
    %c0_7 = arith.constant 0 : index
    %4 = vector.load %arg4[%c0_5, %c0_6, %c0_7] : memref<8x2x32xf32, #tpu.memory_space<vmem>>, vector<8x2x32xf32>
    tpu.vector_store %arg4[%c0_5, %c0_6, %c0_7], %3 {strides = array<i32>} : memref<8x2x32xf32, #tpu.memory_space<vmem>>, vector<8x2x32xf32>,
    return
  }
  func.func @transform_0(%arg0: i32, %arg1: i32) -> (i32, i32, i32) {
    %c0_i32 = arith.constant 0 : i32
    %c0_i32_0 = arith.constant 0 : i32
    return %arg0, %arg1, %c0_i32 : i32, i32, i32
  }
  func.func @transform_1(%arg0: i32, %arg1: i32) -> (i32, i32, i32) {
    %c0_i32 = arith.constant 0 : i32
    %c0_i32_0 = arith.constant 0 : i32
    %c0_i32_1 = arith.constant 0 : i32
    return %arg0, %c0_i32, %c0_i32_0 : i32, i32, i32
  }
  func.func @transform_2(%arg0: i32, %arg1: i32) -> (i32, i32, i32) {
    %c0_i32 = arith.constant 0 : i32
    %c0_i32_0 = arith.constant 0 : i32
    return %arg0, %arg1, %c0_i32 : i32, i32, i32
  }
}

</mosaic_0001>

<llo_original>
// kernel: tpu_custom_call.1
$region0: #{tpu_custom_call.1}
  #allocation0 [shape = 'u32[]', space=smem, size = 0x4, offset = 0x4, fixed_abs, tag = 'smem constant byte address 0x4 - core index']
  #allocation1 [shape = 'u32[144,128]{1,0:T(1,128)}', space=vmem, size = 0x12000, scoped, tag = 'internal scratch']
  %s0 = inlined_call_operand.hbm [shape: f32[8,2,32], index: 0, kind: input, shape index: {}]
  %s1 = inlined_call_operand.hbm [shape: f32[8,1,32], index: 1, kind: input, shape index: {}]
  %s2 = inlined_call_operand.hbm [shape: f32[8,2,32], index: 2, kind: output, shape index: {}]
  %s3 = sld [smem:[#allocation0]]
  $region26: #{tpu_custom_call.1} parent=0
    _
  %s5 = ssub.s32 1, %s3
  %s6 = scalar_select 0, %s5, %s3
  $region1: #{tpu_custom_call.1} parent=0
    #allocation2 [shape = 'u8[8192]{0}', space=vmem, size = 0x2000, scoped, tag = 'input window, operand 0, single buffered']
    #allocation3 [shape = 's32[1]{0}', space=sflag, size = 0x4, scoped, tag = 'scoped memory for tpu_custom_call.1']
    #allocation4 [shape = 's32[1]{0}', space=sflag, size = 0x4, scoped, tag = 'scoped memory for tpu_custom_call.1']
    #allocation5 [shape = 'u8[4096]{0}', space=vmem, size = 0x1000, scoped, tag = 'input window, operand 1, single buffered']
    #allocation6 [shape = 's32[1]{0}', space=sflag, size = 0x4, scoped, tag = 'scoped memory for tpu_custom_call.1']
    #allocation7 [shape = 'u8[8192]{0}', space=vmem, size = 0x2000, scoped, tag = 'output window, operand 0, single buffered']
    %7 = vsyncpa [#allocation3], 0
    %8 = vsyncpa [#allocation6], 0
    %9 = vsyncpa [#allocation4], 0
    // Predicated region
    $region2: #{tpu_custom_call.1} parent=1 // pred_check
      _
    $region3: #{tpu_custom_call.1} parent=1 // pred_check_branch
      %11 = sbr.rel (0) target = $region5
    $region4: #{tpu_custom_call.1} parent=1 // pred_region
      %s13 = ssub.s32 256, 256
      %14 = vsyncadd [#allocation3], %s13
      %s15 = sshll.u32 [#allocation2], 4
      %s16 = int_to_ptr.vmem [resolvable:$true] %s15
      %21 = dma.hbm_to_vmem [thread:$0]  %s0, 256, %s16, [#allocation3], 32, 32, 2
    $region5: #{tpu_custom_call.1} parent=1 // pred_fallthru
      _
    // Predicated region
    $region6: #{tpu_custom_call.1} parent=1 // pred_check
      _
    $region7: #{tpu_custom_call.1} parent=1 // pred_check_branch
      %23 = sbr.rel (0) target = $region9
    $region8: #{tpu_custom_call.1} parent=1 // pred_region
      %s25 = ssub.s32 128, 128
      %26 = vsyncadd [#allocation6], %s25
      %s27 = sshll.u32 [#allocation5], 4
      %s28 = int_to_ptr.vmem [resolvable:$true] %s27
      %33 = dma.hbm_to_vmem [thread:$0]  %s1, 128, %s28, [#allocation6], 16, 16, 1
    $region9: #{tpu_custom_call.1} parent=1 // pred_fallthru
      _
    // Predicated region
    $region10: #{tpu_custom_call.1} parent=1 // pred_check
      _
    $region11: #{tpu_custom_call.1} parent=1 // pred_check_branch
      %35 = sbr.rel (0) target = $region13
    $region12: #{tpu_custom_call.1} parent=1 // pred_region
      %36 = dma.done [#allocation3], 256
    $region13: #{tpu_custom_call.1} parent=1 // pred_fallthru
      _
    // Predicated region
    $region14: #{tpu_custom_call.1} parent=1 // pred_check
      _
    $region15: #{tpu_custom_call.1} parent=1 // pred_check_branch
      %38 = sbr.rel (0) target = $region17
    $region16: #{tpu_custom_call.1} parent=1 // pred_region
      %39 = dma.done [#allocation6], 128
    $region17: #{tpu_custom_call.1} parent=1 // pred_fallthru
      _
    %v40 = vld [vmem:[#allocation2] sm:$0x3]
    %v41 = vld [vmem:[#allocation2 + $0x2] sm:$0x3]
    %v42 = vld [vmem:[#allocation2 + $0x4] sm:$0x3]
    %v43 = vld [vmem:[#allocation2 + $0x6] sm:$0x3]
    %v44 = vld [vmem:[#allocation2 + $0x8] sm:$0x3]
    %v45 = vld [vmem:[#allocation2 + $0xa] sm:$0x3]
    %v46 = vld [vmem:[#allocation2 + $0xc] sm:$0x3]
    %v47 = vld [vmem:[#allocation2 + $0xe] sm:$0x3]
    %v48 = vld [vmem:[#allocation5] sm:$0x1]
    %v49 = vld [vmem:[#allocation5 + $0x1] sm:$0x1]
    %v50 = vld [vmem:[#allocation5 + $0x2] sm:$0x1]
    %v51 = vld [vmem:[#allocation5 + $0x3] sm:$0x1]
    %v52 = vld [vmem:[#allocation5 + $0x4] sm:$0x1]
    %v53 = vld [vmem:[#allocation5 + $0x5] sm:$0x1]
    %v54 = vld [vmem:[#allocation5 + $0x6] sm:$0x1]
    %v55 = vld [vmem:[#allocation5 + $0x7] sm:$0x1]
    %v64 = vlaneseq
    %v65 = vshrl.u32 %v64, 7
    %v66 = vsub.s32 0, %v65
    %v67 = vrot.slane %v48, %v66
    %v68 = vlaneseq
    %v69 = vshrl.u32 %v68, 7
    %v70 = vsub.s32 0, %v69
    %v71 = vrot.slane %v49, %v70
    %v72 = vlaneseq
    %v73 = vshrl.u32 %v72, 7
    %v74 = vsub.s32 0, %v73
    %v75 = vrot.slane %v50, %v74
    %v76 = vlaneseq
    %v77 = vshrl.u32 %v76, 7
    %v78 = vsub.s32 0, %v77
    %v79 = vrot.slane %v51, %v78
    %v80 = vlaneseq
    %v81 = vshrl.u32 %v80, 7
    %v82 = vsub.s32 0, %v81
    %v83 = vrot.slane %v52, %v82
    %v84 = vlaneseq
    %v85 = vshrl.u32 %v84, 7
    %v86 = vsub.s32 0, %v85
    %v87 = vrot.slane %v53, %v86
    %v88 = vlaneseq
    %v89 = vshrl.u32 %v88, 7
    %v90 = vsub.s32 0, %v89
    %v91 = vrot.slane %v54, %v90
    %v92 = vlaneseq
    %v93 = vshrl.u32 %v92, 7
    %v94 = vsub.s32 0, %v93
    %v95 = vrot.slane %v55, %v94
    %v104 = vadd.f32 %v40, %v67
    %v105 = vadd.f32 %v41, %v71
    %v106 = vadd.f32 %v42, %v75
    %v107 = vadd.f32 %v43, %v79
    %v108 = vadd.f32 %v44, %v83
    %v109 = vadd.f32 %v45, %v87
    %v110 = vadd.f32 %v46, %v91
    %v111 = vadd.f32 %v47, %v95
    %vm112 = vcmask 254976
    %113 = vst.msk [vmem:[#allocation7] sm:$0x3] %vm112, %v104
    %114 = vst.msk [vmem:[#allocation7 + $0x2] sm:$0x3] %vm112, %v105
    %115 = vst.msk [vmem:[#allocation7 + $0x4] sm:$0x3] %vm112, %v106
    %116 = vst.msk [vmem:[#allocation7 + $0x6] sm:$0x3] %vm112, %v107
    %117 = vst.msk [vmem:[#allocation7 + $0x8] sm:$0x3] %vm112, %v108
    %118 = vst.msk [vmem:[#allocation7 + $0xa] sm:$0x3] %vm112, %v109
    %119 = vst.msk [vmem:[#allocation7 + $0xc] sm:$0x3] %vm112, %v110
    %120 = vst.msk [vmem:[#allocation7 + $0xe] sm:$0x3] %vm112, %v111
    // Predicated region
    $region18: #{tpu_custom_call.1} parent=1 // pred_check
      _
    $region19: #{tpu_custom_call.1} parent=1 // pred_check_branch
      %122 = sbr.rel (0) target = $region21
    $region20: #{tpu_custom_call.1} parent=1 // pred_region
      %s124 = ssub.s32 256, 256
      %125 = vsyncadd [#allocation4], %s124
      %s126 = sshll.u32 [#allocation7], 4
      %s127 = int_to_ptr.vmem [resolvable:$true] %s126
      %132 = dma.vmem_to_hbm [thread:$0]  %s127, 256, %s2, [#allocation4], 32, 32, 2
    $region21: #{tpu_custom_call.1} parent=1 // pred_fallthru
      _
    // Predicated region
    $region22: #{tpu_custom_call.1} parent=1 // pred_check
      _
    $region23: #{tpu_custom_call.1} parent=1 // pred_check_branch
      %134 = sbr.rel (0) target = $region25
    $region24: #{tpu_custom_call.1} parent=1 // pred_region
      %135 = dma.done [#allocation4], 256
    $region25: #{tpu_custom_call.1} parent=1 // pred_fallthru
      _
    %136 = vsyncpa [#allocation3], 1
    %137 = vsyncpa [#allocation6], 1
    %138 = vsyncpa [#allocation4], 1

</llo_original>
